<compile_context>
chip_gen: v6e
topology: v6e:2x2x1
jax: 0.10.0
libtpu: 0.0.40
codegen_flags: <defaults>
</compile_context>

<pallas_src>
import jax
import jax.numpy as jnp
from jax.experimental import pallas as pl
from jax.experimental.pallas import tpu as pltpu


def _round_up(n, m):
    return ((n + m - 1) // m) * m


# ----------------------------------------------------------------------------
# Kernel body: one batch tile, fully-resident (pre-transposed) weights.
# ----------------------------------------------------------------------------
def _autoencoder_kernel(x_ref, w1_ref, b1_ref, w2_ref, b2_ref, out_ref):
    # Cast the streamed f32 activations to the MXU compute dtype in-kernel
    # (avoids a separate full-HBM-pass cast op in the wrapper).
    x = x_ref[...].astype(w1_ref.dtype)
    # Encoder: h = x @ W1^T_prepped + b1   -> (tb, hidden_p), f32 accumulation.
    h = jnp.dot(x, w1_ref[...], preferred_element_type=jnp.float32)
    h = h + b1_ref[...]                       # bias add in f32 (VPU)
    # Decoder: y = h @ W2^T_prepped + b2   -> (tb, size)
    y = jnp.dot(h.astype(w2_ref.dtype), w2_ref[...],
                preferred_element_type=jnp.float32)
    y = y + b2_ref[...]
    out_ref[...] = y.astype(out_ref.dtype)


# ----------------------------------------------------------------------------
# One-time parameter preparation (hoisted out of the forward call).
# ----------------------------------------------------------------------------
def prepare_params(w1, b1, w2, b2, *, compute_dtype=jnp.bfloat16,
                   lane_multiple=128):
    """Transpose PyTorch (out, in) weights to (in, out), cast to the MXU compute
    dtype, zero-pad hidden to a lane multiple (numerically exact), and reshape
    biases to broadcastable f32 rows. Call once; reuse the result per forward."""
    hidden, size = w1.shape
    hidden_p = _round_up(hidden, lane_multiple)
    pad_h = hidden_p - hidden
    w1_t = jnp.pad(w1.astype(compute_dtype).T, ((0, 0), (0, pad_h)))   # (size, hidden_p)
    b1_row = jnp.pad(b1.astype(jnp.float32), (0, pad_h)).reshape(1, hidden_p)
    w2_t = jnp.pad(w2.astype(compute_dtype).T, ((0, pad_h), (0, 0)))   # (hidden_p, size)
    b2_row = b2.astype(jnp.float32).reshape(1, size)
    return w1_t, b1_row, w2_t, b2_row


# ----------------------------------------------------------------------------
# Forward pass.
# ----------------------------------------------------------------------------
def linear_autoencoder_forward(x, w1_t, b1_row, w2_t, b2_row, *,
                               block_b=512, out_dtype=None):
    """Forward pass: decoder(encoder(x)) with params from prepare_params.

    x:      (B, size) input (any float dtype; cast to bf16 in-kernel)
    w1_t:   (size, hidden_p)  prepped encoder weight
    b1_row: (1, hidden_p)     prepped encoder bias (f32)
    w2_t:   (hidden_p, size)  prepped decoder weight
    b2_row: (1, size)         prepped decoder bias (f32)
    """
    B, size = x.shape
    hidden_p = w1_t.shape[1]
    out_dtype = x.dtype if out_dtype is None else out_dtype

    # Batch tile: multiple of 8 (sublane), capped at block_b.
    tb = min(block_b, _round_up(B, 8))
    tb = max(8, (tb // 8) * 8)
    # Keep the grid >= 2 so the "parallel" batch axis splits across v7x's two
    # TensorCores (near-zero cost on single-core v5e/v6e).
    while pl.cdiv(B, tb) < 2 and tb > 8:
        tb = max(8, ((tb // 2) // 8) * 8)

    grid = (pl.cdiv(B, tb),)   # ragged tail handled by Pallas block masking

    # Generation-aware VMEM budget: resident weights/biases + double-buffered
    # x/out tiles; never clamp below the actual requirement.
    itemsize_w = jnp.dtype(w1_t.dtype).itemsize
    resident = (w1_t.size + w2_t.size) * itemsize_w + (b1_row.size + b2_row.size) * 4
    streamed = 2 * tb * size * jnp.dtype(x.dtype).itemsize \
             + 2 * tb * size * jnp.dtype(out_dtype).itemsize
    required = resident + streamed
    try:
        vmem_cap = int(pltpu.get_tpu_info().vmem_capacity_bytes)
    except Exception:
        vmem_cap = 64 << 20   # conservative (v7x per-core) if query unavailable
    vmem_limit = int(min(vmem_cap - (8 << 20), max(2 * required, 32 << 20)))
    vmem_limit = max(vmem_limit, required + (4 << 20))

    cost = pl.CostEstimate(
        flops=4 * B * size * hidden_p,
        transcendentals=0,
        bytes_accessed=int(x.size * jnp.dtype(x.dtype).itemsize
                           + resident
                           + B * size * jnp.dtype(out_dtype).itemsize),
    )

    return pl.pallas_call(
        _autoencoder_kernel,
        out_shape=jax.ShapeDtypeStruct((B, size), out_dtype),
        grid=grid,
        in_specs=[
            pl.BlockSpec((tb, size), lambda i: (i, 0)),          # x: streamed
            pl.BlockSpec((size, hidden_p), lambda i: (0, 0)),    # W1^T: resident
            pl.BlockSpec((1, hidden_p), lambda i: (0, 0)),       # b1: resident
            pl.BlockSpec((hidden_p, size), lambda i: (0, 0)),    # W2^T: resident
            pl.BlockSpec((1, size), lambda i: (0, 0)),           # b2: resident
        ],
        out_specs=pl.BlockSpec((tb, size), lambda i: (i, 0)),
        compiler_params=pltpu.CompilerParams(
            dimension_semantics=("parallel",),
            vmem_limit_bytes=vmem_limit,
        ),
        cost_estimate=cost,
    )(x, w1_t, b1_row, w2_t, b2_row)


def init_params(key, size, reduction, dtype=jnp.float32):
    """Deterministic PyTorch-style init: U(-1/sqrt(fan_in), 1/sqrt(fan_in))."""
    hidden = int(size * reduction)
    k1, k2, k3, k4 = jax.random.split(key, 4)
    bound_enc = 1.0 / (size ** 0.5)
    bound_dec = 1.0 / (hidden ** 0.5)
    w1 = jax.random.uniform(k1, (hidden, size), dtype, -bound_enc, bound_enc)
    b1 = jax.random.uniform(k2, (hidden,), dtype, -bound_enc, bound_enc)
    w2 = jax.random.uniform(k3, (size, hidden), dtype, -bound_dec, bound_dec)
    b2 = jax.random.uniform(k4, (size,), dtype, -bound_dec, bound_dec)
    return w1, b1, w2, b2


if __name__ == "__main__":
    size = 128          # input feature size (lane-aligned)
    reduction = 0.25    # hidden = 32 (padded to 128 in prepare_params)
    batch = 128

    key = jax.random.PRNGKey(0)
    kx, kp = jax.random.split(key)
    x = jax.random.normal(kx, (batch, size), jnp.float32)
    w1, b1, w2, b2 = init_params(kp, size, reduction)

    # One-time weight prep (transpose / bf16 cast / hidden pad) — NOT per call.
    w1_t, b1_row, w2_t, b2_row = prepare_params(w1, b1, w2, b2)

    out = linear_autoencoder_forward(x, w1_t, b1_row, w2_t, b2_row)
    out = jax.block_until_ready(out)

    # Pure-JAX f32 reference (kernel uses bf16 MXU operands with f32
    # accumulation, so tolerances are loosened accordingly).
    ref = (x @ w1.T + b1) @ w2.T + b2
    assert out.shape == (batch, size)
    assert jnp.allclose(out, ref, atol=2e-2, rtol=2e-2), \
        float(jnp.max(jnp.abs(out - ref)))

    print("KERNEL_OK")
</pallas_src>

<mosaic_0001>
module attributes {stable_mosaic.version = 11 : i64} {
  func.func @_autoencoder_kernel(%arg0: i32, %arg1: memref<64x128xf32, #tpu.memory_space<vmem>>, %arg2: memref<128x128xbf16, #tpu.memory_space<vmem>>, %arg3: memref<1x128xf32, #tpu.memory_space<vmem>>, %arg4: memref<128x128xbf16, #tpu.memory_space<vmem>>, %arg5: memref<1x128xf32, #tpu.memory_space<vmem>>, %arg6: memref<64x128xf32, #tpu.memory_space<vmem>>) attributes {dimension_semantics = [#tpu.dimension_semantics<parallel>], iteration_bounds = array<i64: 2>, scalar_prefetch = 0 : i64, scratch_operands = 0 : i64, tpu.core_type = #tpu.core_type<tc>, window_params = [{transform_indices = @transform_0, window_bounds = array<i64: 64, 128>}, {pipeline_mode = #tpu.pipeline_mode<synchronous>, transform_indices = @transform_1, window_bounds = array<i64: 128, 128>}, {pipeline_mode = #tpu.pipeline_mode<synchronous>, transform_indices = @transform_2, window_bounds = array<i64: 1, 128>}, {pipeline_mode = #tpu.pipeline_mode<synchronous>, transform_indices = @transform_3, window_bounds = array<i64: 128, 128>}, {pipeline_mode = #tpu.pipeline_mode<synchronous>, transform_indices = @transform_4, window_bounds = array<i64: 1, 128>}, {transform_indices = @transform_5, window_bounds = array<i64: 64, 128>}]} {
    %c0 = arith.constant 0 : index
    %c0_0 = arith.constant 0 : index
    %0 = vector.load %arg1[%c0, %c0_0] : memref<64x128xf32, #tpu.memory_space<vmem>>, vector<64x128xf32>
    %1 = arith.truncf %0 : vector<64x128xf32> to vector<64x128xbf16>
    %c0_1 = arith.constant 0 : index
    %c0_2 = arith.constant 0 : index
    %2 = vector.load %arg2[%c0_1, %c0_2] : memref<128x128xbf16, #tpu.memory_space<vmem>>, vector<128x128xbf16>
    %cst = arith.constant dense<0.000000e+00> : vector<64x128xf32>
    %3 = tpu.matmul %1, %2, %cst {dimension_numbers = #tpu.dot_dimension_numbers<[1], [0], [0], [1], [0, 0, 1, 1], [], []>} : vector<64x128xbf16>, vector<128x128xbf16>, vector<64x128xf32> -> vector<64x128xf32>
    %c0_3 = arith.constant 0 : index
    %c0_4 = arith.constant 0 : index
    %4 = vector.load %arg3[%c0_3, %c0_4] : memref<1x128xf32, #tpu.memory_space<vmem>>, vector<1x128xf32>
    %5 = vector.broadcast %4 : vector<1x128xf32> to vector<64x128xf32>
    %6 = arith.addf %3, %5 : vector<64x128xf32>
    %7 = arith.truncf %6 : vector<64x128xf32> to vector<64x128xbf16>
    %c0_5 = arith.constant 0 : index
    %c0_6 = arith.constant 0 : index
    %8 = vector.load %arg4[%c0_5, %c0_6] : memref<128x128xbf16, #tpu.memory_space<vmem>>, vector<128x128xbf16>
    %cst_7 = arith.constant dense<0.000000e+00> : vector<64x128xf32>
    %9 = tpu.matmul %7, %8, %cst_7 {dimension_numbers = #tpu.dot_dimension_numbers<[1], [0], [0], [1], [0, 0, 1, 1], [], []>} : vector<64x128xbf16>, vector<128x128xbf16>, vector<64x128xf32> -> vector<64x128xf32>
    %c0_8 = arith.constant 0 : index
    %c0_9 = arith.constant 0 : index
    %10 = vector.load %arg5[%c0_8, %c0_9] : memref<1x128xf32, #tpu.memory_space<vmem>>, vector<1x128xf32>
    %11 = vector.broadcast %10 : vector<1x128xf32> to vector<64x128xf32>
    %12 = arith.addf %9, %11 : vector<64x128xf32>
    %c0_10 = arith.constant 0 : index
    %c0_11 = arith.constant 0 : index
    %13 = vector.load %arg6[%c0_10, %c0_11] : memref<64x128xf32, #tpu.memory_space<vmem>>, vector<64x128xf32>
    tpu.vector_store %arg6[%c0_10, %c0_11], %12 {strides = array<i32>} : memref<64x128xf32, #tpu.memory_space<vmem>>, vector<64x128xf32>,
    return
  }
  func.func @transform_0(%arg0: i32) -> (i32, i32) {
    %c0_i32 = arith.constant 0 : i32
    %c0_i32_0 = arith.constant 0 : i32
    return %arg0, %c0_i32 : i32, i32
  }
  func.func @transform_1(%arg0: i32) -> (i32, i32) {
    %c0_i32 = arith.constant 0 : i32
    %c0_i32_0 = arith.constant 0 : i32
    %c0_i32_1 = arith.constant 0 : i32
    return %c0_i32, %c0_i32_0 : i32, i32
  }
  func.func @transform_2(%arg0: i32) -> (i32, i32) {
    %c0_i32 = arith.constant 0 : i32
    %c0_i32_0 = arith.constant 0 : i32
    %c0_i32_1 = arith.constant 0 : i32
    return %c0_i32, %c0_i32_0 : i32, i32
  }
  func.func @transform_3(%arg0: i32) -> (i32, i32) {
    %c0_i32 = arith.constant 0 : i32
    %c0_i32_0 = arith.constant 0 : i32
    %c0_i32_1 = arith.constant 0 : i32
    return %c0_i32, %c0_i32_0 : i32, i32
  }
  func.func @transform_4(%arg0: i32) -> (i32, i32) {
    %c0_i32 = arith.constant 0 : i32
    %c0_i32_0 = arith.constant 0 : i32
    %c0_i32_1 = arith.constant 0 : i32
    return %c0_i32, %c0_i32_0 : i32, i32
  }
  func.func @transform_5(%arg0: i32) -> (i32, i32) {
    %c0_i32 = arith.constant 0 : i32
    %c0_i32_0 = arith.constant 0 : i32
    return %arg0, %c0_i32 : i32, i32
  }
}

</mosaic_0001>

<llo_original>
// kernel: tpu_custom_call.1
$region0: #{tpu_custom_call.1}
  #allocation0 [shape = 'u32[]', space=smem, size = 0x4, offset = 0x4, fixed_abs, tag = 'smem constant byte address 0x4 - core index']
  #allocation1 [shape = 'u32[144,128]{1,0:T(1,128)}', space=vmem, size = 0x12000, scoped, tag = 'internal scratch']
  %s0 = inlined_call_operand.hbm [shape: f32[128,128], index: 0, kind: input, shape index: {}]
  %s1 = inlined_call_operand.hbm [shape: bf16[128,128], index: 1, kind: input, shape index: {}]
  %s2 = inlined_call_operand.vmem [shape: f32[1,128], index: 2, kind: input, shape index: {}]
  %s3 = inlined_call_operand.hbm [shape: bf16[128,128], index: 3, kind: input, shape index: {}]
  %s4 = inlined_call_operand.vmem [shape: f32[1,128], index: 4, kind: input, shape index: {}]
  %s5 = inlined_call_operand.hbm [shape: f32[128,128], index: 5, kind: output, shape index: {}]
  %s6 = sld [smem:[#allocation0]]
  $region65: #{tpu_custom_call.1} parent=0
    _
  %s8 = ssub.s32 1, %s6
  %s9 = scalar_select 0, %s8, %s6
  $region1: #{tpu_custom_call.1} parent=0
    #allocation2 [shape = 'u8[65536]{0}', space=vmem, size = 0x10000, scoped, tag = 'input window, operand 0']
    #allocation3 [shape = 's32[2]{0}', space=sflag, size = 0x8, scoped, tag = 'scoped memory for tpu_custom_call.1']
    #allocation4 [shape = 's32[2]{0}', space=sflag, size = 0x8, scoped, tag = 'scoped memory for tpu_custom_call.1']
    #allocation5 [shape = 'u8[32768]{0}', space=vmem, size = 0x8000, scoped, tag = 'input window, operand 1, single buffered']
    #allocation6 [shape = 's32[1]{0}', space=sflag, size = 0x4, scoped, tag = 'scoped memory for tpu_custom_call.1']
    #allocation7 [shape = 'u8[32768]{0}', space=vmem, size = 0x8000, scoped, tag = 'input window, operand 3, single buffered']
    #allocation8 [shape = 'u8[65536]{0}', space=vmem, size = 0x10000, scoped, tag = 'output window, operand 0']
    %10 = vsyncpa [#allocation3], 0
    %s11 = scalar_lea.sflag [#allocation3], 1
    %12 = vsyncpa %s11, 0
    %13 = vsyncpa [#allocation6], 0
    %14 = vsyncpa [#allocation4], 0
    %s15 = scalar_lea.sflag [#allocation4], 1
    %16 = vsyncpa %s15, 0
    loop: start=0, step=1, limit=4
    $region2: #{tpu_custom_call.1} parent=1 // loop_pre_header
      _
    $region3: #{tpu_custom_call.1} parent=1 // loop_header
      %s18 = sphi 0, %s22
      %p19 = scmp.ge.s32.totalorder %s18, 4
      %s28 = sphi 0, %s30
      %s31 = sphi 0, %s28
      %s32 = sphi 0, %s31
      %s48 = sphi 0, %s32
      %s52 = sphi 0, %s52
      %s54 = sphi 0, %s52
      %s55 = sphi 0, %s54
      %s69 = sphi 0, %s55
      %s73 = sphi 0, %s73
      %s75 = sphi 0, %s73
      %s76 = sphi 0, %s75
      %s90 = sphi 0, %s76
      %s94 = sphi 0, %s94
      %s96 = sphi 0, %s94
      %s97 = sphi 0, %s96
      %s111 = sphi 0, %s97
      %s115 = sphi 0, %s115
      %s117 = sphi 0, %s115
      %s118 = sphi 0, %s117
      %s132 = sphi 0, %s118
      %s138 = sphi 0, %s140
      %s141 = sphi 0, %s138
      %s142 = sphi 0, %s141
      %s158 = sphi 0, %s142
    $region4: #{tpu_custom_call.1} parent=1 // loop_header_branch
      %21 = sbr.rel (%p19) target = $region8
    $region5: #{tpu_custom_call.1} parent=1 // loop_body
      %s23 = ssub.s32 %s18, 1
      %s24 = ssub.s32 %s18, 2
      %s25 = sadd.s32 %s18, 1
      %s26 = ssub.s32 %s18, %s25
      %p27 = scmp.eq.s32.totalorder %s26, 0
      %s29 = sadd.s32 %s28, 1
      %s30 = scalar_select %p27, %s28, %s29
      %p33 = pneg %p27
      %p34 = scmp.eq.s32.totalorder %s18, 1
      %p35 = por %p33, %p34
      %p36 = scmp.ne.s32.totalorder %s28, %s31
      %p37 = scmp.eq.s32.totalorder %s18, 0
      %p38 = por %p36, %p37
      %p39 = scmp.ne.s32.totalorder %s28, %s31
      %p40 = scmp.eq.s32.totalorder %s23, 1
      %p41 = por %p39, %p40
      %p42 = scmp.ne.s32.totalorder %s31, %s32
      %p43 = scmp.eq.s32.totalorder %s23, 0
      %p44 = por %p42, %p43
      %p45 = scmp.ne.s32.totalorder %s31, %s32
      %p46 = scmp.eq.s32.totalorder %s24, 1
      %p47 = por %p45, %p46
      %p49 = scmp.ne.s32.totalorder %s32, %s48
      %p50 = scmp.eq.s32.totalorder %s24, 0
      %p51 = por %p49, %p50
      %s53 = sadd.s32 %s52, 1
      %p56 = scmp.eq.s32.totalorder %s18, 1
      %p57 = scmp.ne.s32.totalorder %s52, %s54
      %p58 = scmp.eq.s32.totalorder %s18, 0
      %p59 = por %p57, %p58
      %p60 = scmp.ne.s32.totalorder %s52, %s54
      %p61 = scmp.eq.s32.totalorder %s23, 1
      %p62 = por %p60, %p61
      %p63 = scmp.ne.s32.totalorder %s54, %s55
      %p64 = scmp.eq.s32.totalorder %s23, 0
      %p65 = por %p63, %p64
      %p66 = scmp.ne.s32.totalorder %s54, %s55
      %p67 = scmp.eq.s32.totalorder %s24, 1
      %p68 = por %p66, %p67
      %p70 = scmp.ne.s32.totalorder %s55, %s69
      %p71 = scmp.eq.s32.totalorder %s24, 0
      %p72 = por %p70, %p71
      %s74 = sadd.s32 %s73, 1
      %p77 = scmp.eq.s32.totalorder %s18, 1
      %p78 = scmp.ne.s32.totalorder %s73, %s75
      %p79 = scmp.eq.s32.totalorder %s18, 0
      %p80 = por %p78, %p79
      %p81 = scmp.ne.s32.totalorder %s73, %s75
      %p82 = scmp.eq.s32.totalorder %s23, 1
      %p83 = por %p81, %p82
      %p84 = scmp.ne.s32.totalorder %s75, %s76
      %p85 = scmp.eq.s32.totalorder %s23, 0
      %p86 = por %p84, %p85
      %p87 = scmp.ne.s32.totalorder %s75, %s76
      %p88 = scmp.eq.s32.totalorder %s24, 1
      %p89 = por %p87, %p88
      %p91 = scmp.ne.s32.totalorder %s76, %s90
      %p92 = scmp.eq.s32.totalorder %s24, 0
      %p93 = por %p91, %p92
      %s95 = sadd.s32 %s94, 1
      %p98 = scmp.eq.s32.totalorder %s18, 1
      %p99 = scmp.ne.s32.totalorder %s94, %s96
      %p100 = scmp.eq.s32.totalorder %s18, 0
      %p101 = por %p99, %p100
      %p102 = scmp.ne.s32.totalorder %s94, %s96
      %p103 = scmp.eq.s32.totalorder %s23, 1
      %p104 = por %p102, %p103
      %p105 = scmp.ne.s32.totalorder %s96, %s97
      %p106 = scmp.eq.s32.totalorder %s23, 0
      %p107 = por %p105, %p106
      %p108 = scmp.ne.s32.totalorder %s96, %s97
      %p109 = scmp.eq.s32.totalorder %s24, 1
      %p110 = por %p108, %p109
      %p112 = scmp.ne.s32.totalorder %s97, %s111
      %p113 = scmp.eq.s32.totalorder %s24, 0
      %p114 = por %p112, %p113
      %s116 = sadd.s32 %s115, 1
      %p119 = scmp.eq.s32.totalorder %s18, 1
      %p120 = scmp.ne.s32.totalorder %s115, %s117
      %p121 = scmp.eq.s32.totalorder %s18, 0
      %p122 = por %p120, %p121
      %p123 = scmp.ne.s32.totalorder %s115, %s117
      %p124 = scmp.eq.s32.totalorder %s23, 1
      %p125 = por %p123, %p124
      %p126 = scmp.ne.s32.totalorder %s117, %s118
      %p127 = scmp.eq.s32.totalorder %s23, 0
      %p128 = por %p126, %p127
      %p129 = scmp.ne.s32.totalorder %s117, %s118
      %p130 = scmp.eq.s32.totalorder %s24, 1
      %p131 = por %p129, %p130
      %p133 = scmp.ne.s32.totalorder %s118, %s132
      %p134 = scmp.eq.s32.totalorder %s24, 0
      %p135 = por %p133, %p134
      %s136 = ssub.s32 %s18, %s25
      %p137 = scmp.eq.s32.totalorder %s136, 0
      %s139 = sadd.s32 %s138, 1
      %s140 = scalar_select %p137, %s138, %s139
      %p143 = pneg %p137
      %p144 = scmp.eq.s32.totalorder %s18, 1
      %p145 = por %p143, %p144
      %p146 = scmp.ne.s32.totalorder %s138, %s141
      %p147 = scmp.eq.s32.totalorder %s18, 0
      %p148 = por %p146, %p147
      %p149 = scmp.ne.s32.totalorder %s138, %s141
      %p150 = scmp.eq.s32.totalorder %s23, 1
      %p151 = por %p149, %p150
      %p152 = scmp.ne.s32.totalorder %s141, %s142
      %p153 = scmp.eq.s32.totalorder %s23, 0
      %p154 = por %p152, %p153
      %p155 = scmp.ne.s32.totalorder %s141, %s142
      %p156 = scmp.eq.s32.totalorder %s24, 1
      %p157 = por %p155, %p156
      %p159 = scmp.ne.s32.totalorder %s142, %s158
      %p160 = scmp.eq.s32.totalorder %s24, 0
      %p161 = por %p159, %p160
      %p162 = scmp.le.s32.totalorder 1, %s18
      %p163 = scmp.lt.s32.totalorder %s18, 3
      %p164 = pnand %p162, %p163
      %p165 = pneg %p164
      // Predicated region
      $region9: #{tpu_custom_call.1} parent=5 // pred_check
        _
      $region10: #{tpu_custom_call.1} parent=5 // pred_check_branch
        %167 = sbr.rel (%p164) target = $region12
      $region11: #{tpu_custom_call.1} parent=5 // pred_region
        %s168 = ssub.s32 %s18, 1
        // Predicated region
        $region13: #{tpu_custom_call.1} parent=11 // pred_check
          %p169 = pneg %p65
        $region14: #{tpu_custom_call.1} parent=11 // pred_check_branch
          %171 = sbr.rel (%p169) target = $region16
        $region15: #{tpu_custom_call.1} parent=11 // pred_region
          %s173 = ssub.s32 1024, 1024
          %174 = vsyncadd [#allocation6], %s173
          %s175 = sshll.u32 [#allocation5], 4
          %s176 = int_to_ptr.vmem [resolvable:$true] %s175
          %181 = dma.hbm_to_vmem [thread:$0]  %s1, 1024, %s176, [#allocation6], 64, 64, 4
        $region16: #{tpu_custom_call.1} parent=11 // pred_fallthru
          _
        // Predicated region
        $region17: #{tpu_custom_call.1} parent=11 // pred_check
          %p182 = pneg %p86
        $region18: #{tpu_custom_call.1} parent=11 // pred_check_branch
          %184 = sbr.rel (%p182) target = $region20
        $region19: #{tpu_custom_call.1} parent=11 // pred_region
          _
        $region20: #{tpu_custom_call.1} parent=11 // pred_fallthru
          _
        // Predicated region
        $region21: #{tpu_custom_call.1} parent=11 // pred_check
          %p185 = pneg %p107
        $region22: #{tpu_custom_call.1} parent=11 // pred_check_branch
          %187 = sbr.rel (%p185) target = $region24
        $region23: #{tpu_custom_call.1} parent=11 // pred_region
          %s189 = ssub.s32 1024, 1024
          %190 = vsyncadd [#allocation6], %s189
          %s191 = sshll.u32 [#allocation7], 4
          %s192 = int_to_ptr.vmem [resolvable:$true] %s191
          %197 = dma.hbm_to_vmem [thread:$0]  %s3, 1024, %s192, [#allocation6], 64, 64, 4
        $region24: #{tpu_custom_call.1} parent=11 // pred_fallthru
          _
        // Predicated region
        $region25: #{tpu_custom_call.1} parent=11 // pred_check
          %p198 = pneg %p128
        $region26: #{tpu_custom_call.1} parent=11 // pred_check_branch
          %200 = sbr.rel (%p198) target = $region28
        $region27: #{tpu_custom_call.1} parent=11 // pred_region
          _
        $region28: #{tpu_custom_call.1} parent=11 // pred_fallthru
          _
      $region12: #{tpu_custom_call.1} parent=5 // pred_fallthru
        _
      %p201 = scmp.lt.s32.totalorder %s18, 2
      // Predicated region
      $region29: #{tpu_custom_call.1} parent=5 // pred_check
        %p202 = pneg %p201
      $region30: #{tpu_custom_call.1} parent=5 // pred_check_branch
        %204 = sbr.rel (%p202) target = $region32
      $region31: #{tpu_custom_call.1} parent=5 // pred_region
        // Predicated region
        $region33: #{tpu_custom_call.1} parent=31 // pred_check
          %p205 = pneg %p38
        $region34: #{tpu_custom_call.1} parent=31 // pred_check_branch
          %207 = sbr.rel (%p205) target = $region36
        $region35: #{tpu_custom_call.1} parent=31 // pred_region
          %s208 = sand.u32 %s28, 1
          %s209 = scalar_lea.sflag [#allocation3], %s208
          %s210 = sand.u32 %s28, 1
          %s211 = smul.addr %s210, 64
          %s212 = scalar_lea.vmem [#allocation2], %s211
          %s213 = smul.u32 8, %s18
          %s215 = ssub.s32 1024, 1024
          %216 = vsyncadd %s209, %s215
          %s217 = smul.addr %s213, 128
          %s218 = scalar_lea.hbm %s0, %s217
          %s219 = sshll.u32 %s212, 4
          %s220 = int_to_ptr.vmem [resolvable:$true] %s219
          %225 = dma.hbm_to_vmem [thread:$0]  %s218, 1024, %s220, %s209, 128, 128, 8
        $region36: #{tpu_custom_call.1} parent=31 // pred_fallthru
          _
      $region32: #{tpu_custom_call.1} parent=5 // pred_fallthru
        _
      %p226 = scmp.le.s32.totalorder 1, %s18
      %p227 = scmp.lt.s32.totalorder %s18, 3
      %p228 = pnand %p226, %p227
      %p229 = pneg %p228
      // Predicated region
      $region37: #{tpu_custom_call.1} parent=5 // pred_check
        _
      $region38: #{tpu_custom_call.1} parent=5 // pred_check_branch
        %231 = sbr.rel (%p228) target = $region40
      $region39: #{tpu_custom_call.1} parent=5 // pred_region
        %s232 = ssub.s32 %s18, 1
        %s233 = sand.u32 %s31, 1
        %s234 = scalar_lea.sflag [#allocation3], %s233
        %s235 = sand.u32 %s31, 1
        %s236 = smul.addr %s235, 64
        %s237 = scalar_lea.vmem [#allocation2], %s236
        // Predicated region
        $region41: #{tpu_custom_call.1} parent=39 // pred_check
          %p238 = pneg %p44
        $region42: #{tpu_custom_call.1} parent=39 // pred_check_branch
          %240 = sbr.rel (%p238) target = $region44
        $region43: #{tpu_custom_call.1} parent=39 // pred_region
          %241 = dma.done %s234, 1024
        $region44: #{tpu_custom_call.1} parent=39 // pred_fallthru
          _
        // Predicated region
        $region45: #{tpu_custom_call.1} parent=39 // pred_check
          %p242 = pneg %p65
        $region46: #{tpu_custom_call.1} parent=39 // pred_check_branch
          %244 = sbr.rel (%p242) target = $region48
        $region47: #{tpu_custom_call.1} parent=39 // pred_region
          %245 = dma.done [#allocation6], 1024
        $region48: #{tpu_custom_call.1} parent=39 // pred_fallthru
          _
        // Predicated region
        $region49: #{tpu_custom_call.1} parent=39 // pred_check
          %p246 = pneg %p107
        $region50: #{tpu_custom_call.1} parent=39 // pred_check_branch
          %248 = sbr.rel (%p246) target = $region52
        $region51: #{tpu_custom_call.1} parent=39 // pred_region
          %249 = dma.done [#allocation6], 1024
        $region52: #{tpu_custom_call.1} parent=39 // pred_fallthru
          _
        %s250 = sand.u32 %s31, 1
        %s251 = scalar_lea.sflag [#allocation3], %s250
        %s252 = sand.u32 %s31, 1
        %s253 = smul.addr %s252, 64
        %s254 = scalar_lea.vmem [#allocation2], %s253
        %p255 = pneg %p44
        %p256 = pneg %p41
        %p257 = pneg %p65
        %p258 = pneg %p62
        %p259 = pneg %p86
        %p260 = pneg %p83
        %p261 = pneg %p107
        %p262 = pneg %p104
        %p263 = pneg %p128
        %p264 = pneg %p125
        %p265 = pneg %p154
        %p266 = pneg %p151
        %s267 = sand.u32 %s141, 1
        %s268 = scalar_lea.sflag [#allocation4], %s267
        %s269 = sand.u32 %s141, 1
        %s270 = smul.addr %s269, 64
        %s271 = scalar_lea.vmem [#allocation8], %s270
        %s272 = smul.u32 8, %s23
        %s273 = smul.u32 8, %s23
        %v275 = vld [vmem:[%s237] sm:$0xff]
        %v276 = vld [vmem:[%s237 + $0x8] sm:$0xff]
        %v277 = vld [vmem:[%s237 + $0x10] sm:$0xff]
        %v278 = vld [vmem:[%s237 + $0x18] sm:$0xff]
        %v279 = vld [vmem:[%s237 + $0x20] sm:$0xff]
        %v280 = vld [vmem:[%s237 + $0x28] sm:$0xff]
        %v281 = vld [vmem:[%s237 + $0x30] sm:$0xff]
        %v282 = vld [vmem:[%s237 + $0x38] sm:$0xff]
        %v283 = vpack.c.bf16 %v276, %v275
        %v284 = vpack.c.bf16 %v278, %v277
        %v285 = vpack.c.bf16 %v280, %v279
        %v286 = vpack.c.bf16 %v282, %v281
        %v287 = vld [vmem:[#allocation5] sm:$0xf]
        %v288 = vld [vmem:[#allocation5 + $0x4] sm:$0xf]
        %v289 = vld [vmem:[#allocation5 + $0x8] sm:$0xf]
        %v290 = vld [vmem:[#allocation5 + $0xc] sm:$0xf]
        %v291 = vld [vmem:[#allocation5 + $0x10] sm:$0xf]
        %v292 = vld [vmem:[#allocation5 + $0x14] sm:$0xf]
        %v293 = vld [vmem:[#allocation5 + $0x18] sm:$0xf]
        %v294 = vld [vmem:[#allocation5 + $0x1c] sm:$0xf]
        %v295 = vld [vmem:[#allocation5 + $0x20] sm:$0xf]
        %v296 = vld [vmem:[#allocation5 + $0x24] sm:$0xf]
        %v297 = vld [vmem:[#allocation5 + $0x28] sm:$0xf]
        %v298 = vld [vmem:[#allocation5 + $0x2c] sm:$0xf]
        %v299 = vld [vmem:[#allocation5 + $0x30] sm:$0xf]
        %v300 = vld [vmem:[#allocation5 + $0x34] sm:$0xf]
        %v301 = vld [vmem:[#allocation5 + $0x38] sm:$0xf]
        %v302 = vld [vmem:[#allocation5 + $0x3c] sm:$0xf]
        %v303 = vld [vmem:[%s2] sm:$0x1]
        %v305 = vlaneseq
        %v306 = vshrl.u32 %v305, 7
        %v307 = vsub.s32 0, %v306
        %v308 = vrot.slane %v303, %v307
        %v326 = vunpack.c.l.b16 %v287
        %v327 = vunpack.c.l.b16 %v288
        %v328 = vunpack.c.l.b16 %v289
        %v329 = vunpack.c.l.b16 %v290
        %v330 = vunpack.c.l.b16 %v291
        %v331 = vunpack.c.l.b16 %v292
        %v332 = vunpack.c.l.b16 %v293
        %v333 = vunpack.c.l.b16 %v294
        %v334 = vunpack.c.l.b16 %v295
        %v335 = vunpack.c.l.b16 %v296
        %v336 = vunpack.c.l.b16 %v297
        %v337 = vunpack.c.l.b16 %v298
        %v338 = vunpack.c.l.b16 %v299
        %v339 = vunpack.c.l.b16 %v300
        %v340 = vunpack.c.l.b16 %v301
        %v341 = vunpack.c.l.b16 %v302
        %v342 = vpack.c.b16 %v327, %v326
        %v343 = vpack.c.b16 %v329, %v328
        %v344 = vpack.c.b16 %v331, %v330
        %v345 = vpack.c.b16 %v333, %v332
        %v346 = vpack.c.b16 %v335, %v334
        %v347 = vpack.c.b16 %v337, %v336
        %v348 = vpack.c.b16 %v339, %v338
        %v349 = vpack.c.b16 %v341, %v340
        %358 = vmatprep.subr.bf16.mxu0 0
        %359 = vmatpush1.bf16.msra.mxu0 %v349
        %360 = vmatprep.subr.bf16.mxu0 0
        %361 = vmatpush1.bf16.msra.mxu0 %v348
        %362 = vmatprep.subr.bf16.mxu0 0
        %363 = vmatpush1.bf16.msra.mxu0 %v347
        %364 = vmatprep.subr.bf16.mxu0 0
        %365 = vmatpush1.bf16.msra.mxu0 %v346
        %366 = vmatprep.subr.bf16.mxu0 0
        %367 = vmatpush1.bf16.msra.mxu0 %v345
        %368 = vmatprep.subr.bf16.mxu0 0
        %369 = vmatpush1.bf16.msra.mxu0 %v344
        %370 = vmatprep.subr.bf16.mxu0 0
        %371 = vmatpush1.bf16.msra.mxu0 %v343
        %372 = vmatprep.subr.bf16.mxu0 0
        %373 = vmatpush1.bf16.msra.mxu0 %v342
        %374 = vmatprep.subr.bf16.mxu0 0
        %375 = vmatpush2.bf16.msra.mxu0 0
        %376 = vmatprep.subr.bf16.mxu0 0
        %377 = vmatpush2.bf16.msra.mxu0 0
        %378 = vmatprep.subr.bf16.mxu0 0
        %379 = vmatpush2.bf16.msra.mxu0 0
        %380 = vmatprep.subr.bf16.mxu0 0
        %381 = vmatpush2.bf16.msra.mxu0 0
        %382 = vmatprep.subr.bf16.mxu0 0
        %383 = vmatpush2.bf16.msra.mxu0 0
        %384 = vmatprep.subr.bf16.mxu0 0
        %385 = vmatpush2.bf16.msra.mxu0 0
        %386 = vmatprep.subr.bf16.mxu0 0
        %387 = vmatpush2.bf16.msra.mxu0 0
        %388 = vmatprep.subr.bf16.mxu0 0
        %389 = vmatpush2.bf16.msra.mxu0 0
        %390 = vmatprep.mubr.bf16.mxu0 0
        %391 = vmatmul.mubr.bf16.gmra.mxu0 %v283
        %v392 = vpop.f32.mrf.mxu0
        %v393 = vadd.f32 %v308, %v392
        %v394 = vpop.f32.mrf.mxu0
        %v395 = vpop.f32.mrf.mxu0
        %v396 = vadd.f32 %v308, %v395
        %v397 = vpop.f32.mrf.mxu0
        %398 = vmatprep.mubr.bf16.mxu0 0
        %399 = vmatmul.mubr.bf16.gmra.mxu0 %v284
        %v400 = vpop.f32.mrf.mxu0
        %v401 = vadd.f32 %v308, %v400
        %v402 = vpop.f32.mrf.mxu0
        %v403 = vpop.f32.mrf.mxu0
        %v404 = vadd.f32 %v308, %v403
        %v405 = vpop.f32.mrf.mxu0
        %406 = vmatprep.mubr.bf16.mxu0 0
        %407 = vmatmul.mubr.bf16.gmra.mxu0 %v285
        %v408 = vpop.f32.mrf.mxu0
        %v409 = vadd.f32 %v308, %v408
        %v410 = vpop.f32.mrf.mxu0
        %v411 = vpop.f32.mrf.mxu0
        %v412 = vadd.f32 %v308, %v411
        %v413 = vpop.f32.mrf.mxu0
        %414 = vmatprep.mubr.bf16.mxu0 0
        %415 = vmatmul.mubr.bf16.gmra.mxu0 %v286
        %v416 = vpop.f32.mrf.mxu0
        %v417 = vadd.f32 %v308, %v416
        %v418 = vpop.f32.mrf.mxu0
        %v419 = vpop.f32.mrf.mxu0
        %v420 = vadd.f32 %v308, %v419
        %v421 = vpop.f32.mrf.mxu0
        %422 = vdwg.mxu0
        %v423 = vpack.c.bf16 %v396, %v393
        %v424 = vpack.c.bf16 %v404, %v401
        %v425 = vpack.c.bf16 %v412, %v409
        %v426 = vpack.c.bf16 %v420, %v417
        %v427 = vld [vmem:[#allocation7] sm:$0xf]
        %v428 = vld [vmem:[#allocation7 + $0x4] sm:$0xf]
        %v429 = vld [vmem:[#allocation7 + $0x8] sm:$0xf]
        %v430 = vld [vmem:[#allocation7 + $0xc] sm:$0xf]
        %v431 = vld [vmem:[#allocation7 + $0x10] sm:$0xf]
        %v432 = vld [vmem:[#allocation7 + $0x14] sm:$0xf]
        %v433 = vld [vmem:[#allocation7 + $0x18] sm:$0xf]
        %v434 = vld [vmem:[#allocation7 + $0x1c] sm:$0xf]
        %v435 = vld [vmem:[#allocation7 + $0x20] sm:$0xf]
        %v436 = vld [vmem:[#allocation7 + $0x24] sm:$0xf]
        %v437 = vld [vmem:[#allocation7 + $0x28] sm:$0xf]
        %v438 = vld [vmem:[#allocation7 + $0x2c] sm:$0xf]
        %v439 = vld [vmem:[#allocation7 + $0x30] sm:$0xf]
        %v440 = vld [vmem:[#allocation7 + $0x34] sm:$0xf]
        %v441 = vld [vmem:[#allocation7 + $0x38] sm:$0xf]
        %v442 = vld [vmem:[#allocation7 + $0x3c] sm:$0xf]
        %v443 = vld [vmem:[%s4] sm:$0x1]
        %v445 = vlaneseq
        %v446 = vshrl.u32 %v445, 7
        %v447 = vsub.s32 0, %v446
        %v448 = vrot.slane %v443, %v447
        %v466 = vunpack.c.l.b16 %v427
        %v467 = vunpack.c.l.b16 %v428
        %v468 = vunpack.c.l.b16 %v429
        %v469 = vunpack.c.l.b16 %v430
        %v470 = vunpack.c.l.b16 %v431
        %v471 = vunpack.c.l.b16 %v432
        %v472 = vunpack.c.l.b16 %v433
        %v473 = vunpack.c.l.b16 %v434
        %v474 = vunpack.c.l.b16 %v435
        %v475 = vunpack.c.l.b16 %v436
        %v476 = vunpack.c.l.b16 %v437
        %v477 = vunpack.c.l.b16 %v438
        %v478 = vunpack.c.l.b16 %v439
        %v479 = vunpack.c.l.b16 %v440
        %v480 = vunpack.c.l.b16 %v441
        %v481 = vunpack.c.l.b16 %v442
        %v482 = vpack.c.b16 %v467, %v466
        %v483 = vpack.c.b16 %v469, %v468
        %v484 = vpack.c.b16 %v471, %v470
        %v485 = vpack.c.b16 %v473, %v472
        %v486 = vpack.c.b16 %v475, %v474
        %v487 = vpack.c.b16 %v477, %v476
        %v488 = vpack.c.b16 %v479, %v478
        %v489 = vpack.c.b16 %v481, %v480
        %498 = vmatprep.subr.bf16.mxu0 0
        %499 = vmatpush1.bf16.msra.mxu0 %v489
        %500 = vmatprep.subr.bf16.mxu0 0
        %501 = vmatpush1.bf16.msra.mxu0 %v488
        %502 = vmatprep.subr.bf16.mxu0 0
        %503 = vmatpush1.bf16.msra.mxu0 %v487
        %504 = vmatprep.subr.bf16.mxu0 0
        %505 = vmatpush1.bf16.msra.mxu0 %v486
        %506 = vmatprep.subr.bf16.mxu0 0
        %507 = vmatpush1.bf16.msra.mxu0 %v485
        %508 = vmatprep.subr.bf16.mxu0 0
        %509 = vmatpush1.bf16.msra.mxu0 %v484
        %510 = vmatprep.subr.bf16.mxu0 0
        %511 = vmatpush1.bf16.msra.mxu0 %v483
        %512 = vmatprep.subr.bf16.mxu0 0
        %513 = vmatpush1.bf16.msra.mxu0 %v482
        %514 = vmatprep.subr.bf16.mxu0 0
        %515 = vmatpush2.bf16.msra.mxu0 0
        %516 = vmatprep.subr.bf16.mxu0 0
        %517 = vmatpush2.bf16.msra.mxu0 0
        %518 = vmatprep.subr.bf16.mxu0 0
        %519 = vmatpush2.bf16.msra.mxu0 0
        %520 = vmatprep.subr.bf16.mxu0 0
        %521 = vmatpush2.bf16.msra.mxu0 0
        %522 = vmatprep.subr.bf16.mxu0 0
        %523 = vmatpush2.bf16.msra.mxu0 0
        %524 = vmatprep.subr.bf16.mxu0 0
        %525 = vmatpush2.bf16.msra.mxu0 0
        %526 = vmatprep.subr.bf16.mxu0 0
        %527 = vmatpush2.bf16.msra.mxu0 0
        %528 = vmatprep.subr.bf16.mxu0 0
        %529 = vmatpush2.bf16.msra.mxu0 0
        %530 = vmatprep.mubr.bf16.mxu0 0
        %531 = vmatmul.mubr.bf16.gmra.mxu0 %v423
        %v532 = vpop.f32.mrf.mxu0
        %v533 = vadd.f32 %v448, %v532
        %v534 = vpop.f32.mrf.mxu0
        %v535 = vpop.f32.mrf.mxu0
        %v536 = vadd.f32 %v448, %v535
        %v537 = vpop.f32.mrf.mxu0
        %538 = vmatprep.mubr.bf16.mxu0 0
        %539 = vmatmul.mubr.bf16.gmra.mxu0 %v424
        %v540 = vpop.f32.mrf.mxu0
        %v541 = vadd.f32 %v448, %v540
        %v542 = vpop.f32.mrf.mxu0
        %v543 = vpop.f32.mrf.mxu0
        %v544 = vadd.f32 %v448, %v543
        %v545 = vpop.f32.mrf.mxu0
        %546 = vmatprep.mubr.bf16.mxu0 0
        %547 = vmatmul.mubr.bf16.gmra.mxu0 %v425
        %v548 = vpop.f32.mrf.mxu0
        %v549 = vadd.f32 %v448, %v548
        %v550 = vpop.f32.mrf.mxu0
        %v551 = vpop.f32.mrf.mxu0
        %v552 = vadd.f32 %v448, %v551
        %v553 = vpop.f32.mrf.mxu0
        %554 = vmatprep.mubr.bf16.mxu0 0
        %555 = vmatmul.mubr.bf16.gmra.mxu0 %v426
        %v556 = vpop.f32.mrf.mxu0
        %v557 = vadd.f32 %v448, %v556
        %v558 = vpop.f32.mrf.mxu0
        %v559 = vpop.f32.mrf.mxu0
        %v560 = vadd.f32 %v448, %v559
        %v561 = vpop.f32.mrf.mxu0
        %562 = vdwg.mxu0
        %563 = vst [vmem:[%s271] sm:$0xff] %v533
        %564 = vst [vmem:[%s271 + $0x8] sm:$0xff] %v536
        %565 = vst [vmem:[%s271 + $0x10] sm:$0xff] %v541
        %566 = vst [vmem:[%s271 + $0x18] sm:$0xff] %v544
        %567 = vst [vmem:[%s271 + $0x20] sm:$0xff] %v549
        %568 = vst [vmem:[%s271 + $0x28] sm:$0xff] %v552
        %569 = vst [vmem:[%s271 + $0x30] sm:$0xff] %v557
        %570 = vst [vmem:[%s271 + $0x38] sm:$0xff] %v560
        %s571 = sand.u32 %s141, 1
        %s572 = scalar_lea.sflag [#allocation4], %s571
        %s573 = sand.u32 %s141, 1
        %s574 = smul.addr %s573, 64
        %s575 = scalar_lea.vmem [#allocation8], %s574
        // Predicated region
        $region53: #{tpu_custom_call.1} parent=39 // pred_check
          %p576 = pneg %p151
        $region54: #{tpu_custom_call.1} parent=39 // pred_check_branch
          %578 = sbr.rel (%p576) target = $region56
        $region55: #{tpu_custom_call.1} parent=39 // pred_region
          %s579 = smul.u32 8, %s23
          %s581 = ssub.s32 1024, 1024
          %582 = vsyncadd %s572, %s581
          %s583 = smul.addr %s579, 128
          %s584 = scalar_lea.hbm %s5, %s583
          %s585 = sshll.u32 %s575, 4
          %s586 = int_to_ptr.vmem [resolvable:$true] %s585
          %591 = dma.vmem_to_hbm [thread:$0]  %s586, 1024, %s584, %s572, 128, 128, 8
        $region56: #{tpu_custom_call.1} parent=39 // pred_fallthru
          _
      $region40: #{tpu_custom_call.1} parent=5 // pred_fallthru
        _
      %p592 = scmp.le.s32.totalorder 2, %s18
      // Predicated region
      $region57: #{tpu_custom_call.1} parent=5 // pred_check
        %p593 = pneg %p592
      $region58: #{tpu_custom_call.1} parent=5 // pred_check_branch
        %595 = sbr.rel (%p593) target = $region60
      $region59: #{tpu_custom_call.1} parent=5 // pred_region
        %s596 = ssub.s32 %s18, 2
        // Predicated region
        $region61: #{tpu_custom_call.1} parent=59 // pred_check
          %p597 = pneg %p157
        $region62: #{tpu_custom_call.1} parent=59 // pred_check_branch
          %599 = sbr.rel (%p597) target = $region64
        $region63: #{tpu_custom_call.1} parent=59 // pred_region
          %s600 = sand.u32 %s142, 1
          %s601 = scalar_lea.sflag [#allocation4], %s600
          %s602 = sand.u32 %s142, 1
          %s603 = smul.addr %s602, 64
          %s604 = scalar_lea.vmem [#allocation8], %s603
          %605 = dma.done %s601, 1024
        $region64: #{tpu_custom_call.1} parent=59 // pred_fallthru
          _
      $region60: #{tpu_custom_call.1} parent=5 // pred_fallthru
        _
    $region6: #{tpu_custom_call.1} parent=1 // loop_footer
      %s22 = sadd.s32 1, %s18
    $region7: #{tpu_custom_call.1} parent=1 // loop_footer_branch
      %17 = sbr.rel target = $region3
    $region8: #{tpu_custom_call.1} parent=1 // loop_exit
      _
    %606 = vsyncpa [#allocation3], 1
    %s607 = scalar_lea.sflag [#allocation3], 1
    %608 = vsyncpa %s607, 1
    %609 = vsyncpa [#allocation6], 1
    %610 = vsyncpa [#allocation4], 1
    %s611 = scalar_lea.sflag [#allocation4], 1
    %612 = vsyncpa %s611, 1

</llo_original>
